<compile_context>
chip_gen: v6e
topology: v6e:2x2x1
jax: 0.10.0
libtpu: 0.0.40
codegen_flags: <defaults>
</compile_context>

<pallas_src>
import functools

import jax
import jax.numpy as jnp
from jax import lax
from jax.experimental import pallas as pl
from jax.experimental.pallas import tpu as pltpu


def addnorm_kernel(x_ref, y_ref, gamma_ref, beta_ref, o_ref, *, eps):
    # dropout(Y) in eval mode == Y; accumulate the residual sum in f32.
    s = x_ref[...].astype(jnp.float32) + y_ref[...].astype(jnp.float32)

    # Single-pass statistics: mean = E[x], var = E[x^2] - mean^2 (f32).
    h = s.shape[-1]
    inv_h = 1.0 / float(h)
    row_sum = jnp.sum(s, axis=-1, keepdims=True)
    row_sumsq = jnp.sum(s * s, axis=-1, keepdims=True)
    mean = row_sum * inv_h
    var = jnp.maximum(row_sumsq * inv_h - mean * mean, 0.0)
    inv_std = lax.rsqrt(var + eps)

    gamma = gamma_ref[...].astype(jnp.float32)   # (1, H)
    beta = beta_ref[...].astype(jnp.float32)     # (1, H)

    # Fold mean into the affine so `centered` is never materialized:
    #   out = s * (inv_std * gamma) + (beta - mean * inv_std * gamma)
    scale = inv_std * gamma
    shift = beta - mean * scale
    o_ref[...] = (s * scale + shift).astype(o_ref.dtype)


def _tpu_policy():
    """Generation-aware VMEM / grid policy.

    v7x has 64 MiB VMEM per TensorCore and 2 TCs (grid axis is sharded), so use
    a tighter byte budget and at least 2 grid steps.  v5e/v6e have 128 MiB and
    a single TC (the grid is a serial loop), so one big tile per step wins.
    """
    vmem_cap = None
    try:
        info = pltpu.get_tpu_info()
        for attr in ("vmem_capacity_bytes", "vmem_size_bytes", "vmem_bytes"):
            v = getattr(info, attr, None)
            if isinstance(v, int) and v > 0:
                vmem_cap = v
                break
    except Exception:
        vmem_cap = None
    if vmem_cap is None:
        vmem_cap = 128 << 20  # assume v5e/v6e-class if the query fails

    if vmem_cap <= (64 << 20):
        # v7x-like: 64 MiB/TC, dual TensorCore.
        return dict(buffer_budget_bytes=16 << 20,
                    vmem_cap_bytes=36 << 20,
                    min_grid_steps=2)
    # v5e / v6e: 128 MiB, single TensorCore.
    return dict(buffer_budget_bytes=44 << 20,
                vmem_cap_bytes=64 << 20,
                min_grid_steps=1)


def _choose_block_rows(rows, hidden, in_dtype, out_dtype, *,
                       buffer_budget_bytes, min_grid_steps,
                       max_block_rows=8192):
    """Largest row tile that fits the VMEM budget.

    Budget covers 2 input streams + 1 output stream (each double-buffered by
    the Pallas pipeline) PLUS ~3 full-block f32 intermediates materialized by
    the kernel body.  Capped so the grid keeps >= min_grid_steps iterations
    (only matters on dual-TC v7x) and rounded to a multiple of 16 rows
    (covers f32 and bf16 sublane packing).
    """
    in_b = jnp.dtype(in_dtype).itemsize
    out_b = jnp.dtype(out_dtype).itemsize
    bytes_per_row = (2 * (2 * hidden * in_b)      # 2 inputs, double-buffered
                     + 2 * hidden * out_b         # 1 output, double-buffered
                     + 3 * hidden * 4)            # f32 intermediates in body
    by_vmem = max(buffer_budget_bytes // bytes_per_row, 16)
    by_grid = max(pl.cdiv(rows, min_grid_steps), 16)
    br = min(by_vmem, by_grid, max_block_rows)
    return max((br // 16) * 16, 16)


def add_norm(x, y, gamma, beta, *, eps=1e-5, block_rows=None):
    """LayerNorm(dropout(Y) + X) with dropout in eval mode.

    x, y: (..., H); gamma, beta: (H,). Returns same shape/dtype as x.
    Statistics are accumulated in f32 regardless of input dtype.
    """
    assert x.shape == y.shape
    orig_shape = x.shape
    H = orig_shape[-1]
    rows = 1
    for d in orig_shape[:-1]:
        rows *= d

    out_dtype = x.dtype
    policy = _tpu_policy()
    if block_rows is None:
        block_rows = _choose_block_rows(
            rows, H, x.dtype, out_dtype,
            buffer_budget_bytes=policy["buffer_budget_bytes"],
            min_grid_steps=policy["min_grid_steps"])

    x2 = x.reshape(rows, H)
    y2 = y.reshape(rows, H)
    g2 = gamma.reshape(1, H)
    b2 = beta.reshape(1, H)

    # Ragged last tile is handled inside the pipeline: out-of-bounds rows of
    # the final block compute garbage (rows are independent) and their stores
    # are dropped, so no host-side pad / slice (no extra HBM round-trip).
    grid_steps = pl.cdiv(rows, block_rows)

    # Explicit scoped-VMEM request: double-buffered streams + in-body f32
    # intermediates + gamma/beta, ~20% headroom, clamped per generation.
    in_b = jnp.dtype(x.dtype).itemsize
    out_b = jnp.dtype(out_dtype).itemsize
    tile_elems = block_rows * H
    vmem_bytes = tile_elems * (2 * 2 * in_b + 2 * out_b + 3 * 4)
    vmem_bytes += 4 * H * 4                      # gamma / beta buffers
    vmem_bytes = int(vmem_bytes * 1.2) + (1 << 20)
    vmem_bytes = int(min(max(vmem_bytes, 4 << 20), policy["vmem_cap_bytes"]))

    out = pl.pallas_call(
        functools.partial(addnorm_kernel, eps=eps),
        out_shape=jax.ShapeDtypeStruct((rows, H), out_dtype),
        grid_spec=pltpu.PrefetchScalarGridSpec(
            num_scalar_prefetch=0,
            grid=(grid_steps,),
            in_specs=[
                pl.BlockSpec((block_rows, H), lambda i: (i, 0)),
                pl.BlockSpec((block_rows, H), lambda i: (i, 0)),
                pl.BlockSpec((1, H), lambda i: (0, 0)),   # gamma (same block)
                pl.BlockSpec((1, H), lambda i: (0, 0)),   # beta
            ],
            out_specs=pl.BlockSpec((block_rows, H), lambda i: (i, 0)),
        ),
        compiler_params=pltpu.CompilerParams(
            dimension_semantics=("parallel",),
            vmem_limit_bytes=vmem_bytes),
    )(x2, y2, g2, b2)

    return out.reshape(orig_shape)


def add_norm_ref(x, y, gamma, beta, eps=1e-5):
    s = x.astype(jnp.float32) + y.astype(jnp.float32)
    mean = jnp.mean(s, axis=-1, keepdims=True)
    var = jnp.mean((s - mean) ** 2, axis=-1, keepdims=True)
    return ((s - mean) / jnp.sqrt(var + eps) * gamma + beta).astype(x.dtype)


if __name__ == "__main__":
    key = jax.random.PRNGKey(0)
    kx, ky, kg, kb, kx2, ky2 = jax.random.split(key, 6)

    # --- Test 1: small f32 shapes consistent with the transformer AddNorm. ---
    batch, seq, hidden = 2, 8, 32
    x = jax.random.normal(kx, (batch, seq, hidden), dtype=jnp.float32)
    y = jax.random.normal(ky, (batch, seq, hidden), dtype=jnp.float32)
    # nn.LayerNorm default init is gamma=1, beta=0; perturb deterministically
    # so the scale/shift path is actually exercised.
    gamma = 1.0 + 0.1 * jax.random.normal(kg, (hidden,), dtype=jnp.float32)
    beta = 0.1 * jax.random.normal(kb, (hidden,), dtype=jnp.float32)

    out = jax.block_until_ready(add_norm(x, y, gamma, beta))
    ref = add_norm_ref(x, y, gamma, beta)
    assert out.shape == (batch, seq, hidden)
    assert jnp.allclose(out, ref, atol=1e-5, rtol=1e-5), "f32 mismatch vs reference"

    # --- Test 2: bf16 I/O, row count not divisible by the tile
    # (exercises the in-kernel ragged-last-block path, no host pad/slice). ---
    b2_, s2_, h2_ = 3, 37, 128
    xb = jax.random.normal(kx2, (b2_, s2_, h2_), dtype=jnp.bfloat16)
    yb = jax.random.normal(ky2, (b2_, s2_, h2_), dtype=jnp.bfloat16)
    gb = jnp.ones((h2_,), dtype=jnp.float32)
    bb = jnp.zeros((h2_,), dtype=jnp.float32)

    outb = jax.block_until_ready(add_norm(xb, yb, gb, bb))
    refb = add_norm_ref(xb, yb, gb, bb)
    assert outb.shape == (b2_, s2_, h2_)
    assert jnp.allclose(outb.astype(jnp.float32), refb.astype(jnp.float32),
                        atol=5e-2, rtol=5e-2), "bf16 mismatch vs reference"

    print("KERNEL_OK")
</pallas_src>

<mosaic_0001>
module attributes {stable_mosaic.version = 11 : i64} {
  func.func @addnorm_kernel(%arg0: i32, %arg1: memref<16x32xf32, #tpu.memory_space<vmem>>, %arg2: memref<16x32xf32, #tpu.memory_space<vmem>>, %arg3: memref<1x32xf32, #tpu.memory_space<vmem>>, %arg4: memref<1x32xf32, #tpu.memory_space<vmem>>, %arg5: memref<16x32xf32, #tpu.memory_space<vmem>>) attributes {dimension_semantics = [#tpu.dimension_semantics<parallel>], iteration_bounds = array<i64: 1>, scalar_prefetch = 0 : i64, scratch_operands = 0 : i64, tpu.core_type = #tpu.core_type<tc>, window_params = [{transform_indices = @transform_0, window_bounds = array<i64: 16, 32>}, {transform_indices = @transform_1, window_bounds = array<i64: 16, 32>}, {pipeline_mode = #tpu.pipeline_mode<synchronous>, transform_indices = @transform_2, window_bounds = array<i64: 1, 32>}, {pipeline_mode = #tpu.pipeline_mode<synchronous>, transform_indices = @transform_3, window_bounds = array<i64: 1, 32>}, {transform_indices = @transform_4, window_bounds = array<i64: 16, 32>}]} {
    %c0 = arith.constant 0 : index
    %c0_0 = arith.constant 0 : index
    %0 = vector.load %arg1[%c0, %c0_0] : memref<16x32xf32, #tpu.memory_space<vmem>>, vector<16x32xf32>
    %c0_1 = arith.constant 0 : index
    %c0_2 = arith.constant 0 : index
    %1 = vector.load %arg2[%c0_1, %c0_2] : memref<16x32xf32, #tpu.memory_space<vmem>>, vector<16x32xf32>
    %2 = arith.addf %0, %1 : vector<16x32xf32>
    %cst = arith.constant dense<0.000000e+00> : vector<16xf32>
    %3 = vector.multi_reduction <add>, %2, %cst [1] : vector<16x32xf32> to vector<16xf32>
    %4 = vector.shape_cast %3 : vector<16xf32> to vector<16x1xf32>
    %5 = arith.mulf %2, %2 : vector<16x32xf32>
    %cst_3 = arith.constant dense<0.000000e+00> : vector<16xf32>
    %6 = vector.multi_reduction <add>, %5, %cst_3 [1] : vector<16x32xf32> to vector<16xf32>
    %7 = vector.shape_cast %6 : vector<16xf32> to vector<16x1xf32>
    %cst_4 = arith.constant 3.125000e-02 : f32
    %8 = vector.broadcast %cst_4 : f32 to vector<16x1xf32>
    %9 = arith.mulf %4, %8 : vector<16x1xf32>
    %cst_5 = arith.constant 3.125000e-02 : f32
    %10 = vector.broadcast %cst_5 : f32 to vector<16x1xf32>
    %11 = arith.mulf %7, %10 : vector<16x1xf32>
    %12 = arith.mulf %9, %9 : vector<16x1xf32>
    %13 = arith.subf %11, %12 : vector<16x1xf32>
    %cst_6 = arith.constant 0.000000e+00 : f32
    %14 = vector.broadcast %cst_6 : f32 to vector<16x1xf32>
    %15 = arith.maximumf %13, %14 : vector<16x1xf32>
    %cst_7 = arith.constant 9.99999974E-6 : f32
    %16 = vector.broadcast %cst_7 : f32 to vector<16x1xf32>
    %17 = arith.addf %15, %16 : vector<16x1xf32>
    %18 = math.rsqrt %17 : vector<16x1xf32>
    %c0_8 = arith.constant 0 : index
    %c0_9 = arith.constant 0 : index
    %19 = vector.load %arg3[%c0_8, %c0_9] : memref<1x32xf32, #tpu.memory_space<vmem>>, vector<1x32xf32>
    %c0_10 = arith.constant 0 : index
    %c0_11 = arith.constant 0 : index
    %20 = vector.load %arg4[%c0_10, %c0_11] : memref<1x32xf32, #tpu.memory_space<vmem>>, vector<1x32xf32>
    %21 = vector.broadcast %18 : vector<16x1xf32> to vector<16x32xf32>
    %22 = vector.broadcast %19 : vector<1x32xf32> to vector<16x32xf32>
    %23 = arith.mulf %21, %22 : vector<16x32xf32>
    %24 = vector.broadcast %9 : vector<16x1xf32> to vector<16x32xf32>
    %25 = arith.mulf %24, %23 : vector<16x32xf32>
    %26 = vector.broadcast %20 : vector<1x32xf32> to vector<16x32xf32>
    %27 = arith.subf %26, %25 : vector<16x32xf32>
    %28 = arith.mulf %2, %23 : vector<16x32xf32>
    %29 = arith.addf %28, %27 : vector<16x32xf32>
    %c0_12 = arith.constant 0 : index
    %c0_13 = arith.constant 0 : index
    %30 = vector.load %arg5[%c0_12, %c0_13] : memref<16x32xf32, #tpu.memory_space<vmem>>, vector<16x32xf32>
    tpu.vector_store %arg5[%c0_12, %c0_13], %29 {strides = array<i32>} : memref<16x32xf32, #tpu.memory_space<vmem>>, vector<16x32xf32>,
    return
  }
  func.func @transform_0(%arg0: i32) -> (i32, i32) {
    %c0_i32 = arith.constant 0 : i32
    %c0_i32_0 = arith.constant 0 : i32
    return %arg0, %c0_i32 : i32, i32
  }
  func.func @transform_1(%arg0: i32) -> (i32, i32) {
    %c0_i32 = arith.constant 0 : i32
    %c0_i32_0 = arith.constant 0 : i32
    return %arg0, %c0_i32 : i32, i32
  }
  func.func @transform_2(%arg0: i32) -> (i32, i32) {
    %c0_i32 = arith.constant 0 : i32
    %c0_i32_0 = arith.constant 0 : i32
    %c0_i32_1 = arith.constant 0 : i32
    return %c0_i32, %c0_i32_0 : i32, i32
  }
  func.func @transform_3(%arg0: i32) -> (i32, i32) {
    %c0_i32 = arith.constant 0 : i32
    %c0_i32_0 = arith.constant 0 : i32
    %c0_i32_1 = arith.constant 0 : i32
    return %c0_i32, %c0_i32_0 : i32, i32
  }
  func.func @transform_4(%arg0: i32) -> (i32, i32) {
    %c0_i32 = arith.constant 0 : i32
    %c0_i32_0 = arith.constant 0 : i32
    return %arg0, %c0_i32 : i32, i32
  }
}

</mosaic_0001>

<llo_original>
// kernel: tpu_custom_call.1
$region0: #{tpu_custom_call.1}
  #allocation0 [shape = 'u32[]', space=smem, size = 0x4, offset = 0x4, fixed_abs, tag = 'smem constant byte address 0x4 - core index']
  #allocation1 [shape = 'u32[144,128]{1,0:T(1,128)}', space=vmem, size = 0x12000, scoped, tag = 'internal scratch']
  %s0 = inlined_call_operand.hbm [shape: f32[16,32], index: 0, kind: input, shape index: {}]
  %s1 = inlined_call_operand.hbm [shape: f32[16,32], index: 1, kind: input, shape index: {}]
  %s2 = inlined_call_operand.vmem [shape: f32[1,32], index: 2, kind: input, shape index: {}]
  %s3 = inlined_call_operand.vmem [shape: f32[1,32], index: 3, kind: input, shape index: {}]
  %s4 = inlined_call_operand.hbm [shape: f32[16,32], index: 4, kind: output, shape index: {}]
  %s5 = sld [smem:[#allocation0]]
  $region34: #{tpu_custom_call.1} parent=0
    _
  %s7 = ssub.s32 1, %s5
  %s8 = scalar_select 0, %s7, %s5
  $region1: #{tpu_custom_call.1} parent=0
    #allocation2 [shape = 'u8[8192]{0}', space=vmem, size = 0x2000, scoped, tag = 'input window, operand 0, single buffered']
    #allocation3 [shape = 's32[1]{0}', space=sflag, size = 0x4, scoped, tag = 'scoped memory for tpu_custom_call.1']
    #allocation4 [shape = 's32[1]{0}', space=sflag, size = 0x4, scoped, tag = 'scoped memory for tpu_custom_call.1']
    #allocation5 [shape = 'u8[8192]{0}', space=vmem, size = 0x2000, scoped, tag = 'input window, operand 1, single buffered']
    #allocation6 [shape = 's32[1]{0}', space=sflag, size = 0x4, scoped, tag = 'scoped memory for tpu_custom_call.1']
    #allocation7 [shape = 'u8[8192]{0}', space=vmem, size = 0x2000, scoped, tag = 'output window, operand 0, single buffered']
    %9 = vsyncpa [#allocation3], 0
    %10 = vsyncpa [#allocation6], 0
    %11 = vsyncpa [#allocation4], 0
    // Predicated region
    $region2: #{tpu_custom_call.1} parent=1 // pred_check
      _
    $region3: #{tpu_custom_call.1} parent=1 // pred_check_branch
      %13 = sbr.rel (0) target = $region5
    $region4: #{tpu_custom_call.1} parent=1 // pred_region
      %s15 = ssub.s32 256, 256
      %16 = vsyncadd [#allocation3], %s15
      %s17 = sshll.u32 [#allocation2], 4
      %s18 = int_to_ptr.vmem [resolvable:$true] %s17
      %23 = dma.hbm_to_vmem [thread:$0]  %s0, 256, %s18, [#allocation3], 128, 128, 8
    $region5: #{tpu_custom_call.1} parent=1 // pred_fallthru
      _
    // Predicated region
    $region6: #{tpu_custom_call.1} parent=1 // pred_check
      _
    $region7: #{tpu_custom_call.1} parent=1 // pred_check_branch
      %25 = sbr.rel (0) target = $region9
    $region8: #{tpu_custom_call.1} parent=1 // pred_region
      %s27 = ssub.s32 256, 256
      %28 = vsyncadd [#allocation6], %s27
      %s29 = sshll.u32 [#allocation5], 4
      %s30 = int_to_ptr.vmem [resolvable:$true] %s29
      %35 = dma.hbm_to_vmem [thread:$0]  %s1, 256, %s30, [#allocation6], 128, 128, 8
    $region9: #{tpu_custom_call.1} parent=1 // pred_fallthru
      _
    // Predicated region
    $region10: #{tpu_custom_call.1} parent=1 // pred_check
      _
    $region11: #{tpu_custom_call.1} parent=1 // pred_check_branch
      %37 = sbr.rel (0) target = $region13
    $region12: #{tpu_custom_call.1} parent=1 // pred_region
      _
    $region13: #{tpu_custom_call.1} parent=1 // pred_fallthru
      _
    // Predicated region
    $region14: #{tpu_custom_call.1} parent=1 // pred_check
      _
    $region15: #{tpu_custom_call.1} parent=1 // pred_check_branch
      %39 = sbr.rel (0) target = $region17
    $region16: #{tpu_custom_call.1} parent=1 // pred_region
      _
    $region17: #{tpu_custom_call.1} parent=1 // pred_fallthru
      _
    // Predicated region
    $region18: #{tpu_custom_call.1} parent=1 // pred_check
      _
    $region19: #{tpu_custom_call.1} parent=1 // pred_check_branch
      %41 = sbr.rel (0) target = $region21
    $region20: #{tpu_custom_call.1} parent=1 // pred_region
      %42 = dma.done [#allocation3], 256
    $region21: #{tpu_custom_call.1} parent=1 // pred_fallthru
      _
    // Predicated region
    $region22: #{tpu_custom_call.1} parent=1 // pred_check
      _
    $region23: #{tpu_custom_call.1} parent=1 // pred_check_branch
      %44 = sbr.rel (0) target = $region25
    $region24: #{tpu_custom_call.1} parent=1 // pred_region
      %45 = dma.done [#allocation6], 256
    $region25: #{tpu_custom_call.1} parent=1 // pred_fallthru
      _
    %v46 = vld [vmem:[#allocation2] sm:$0xff]
    %v47 = vld [vmem:[#allocation2 + $0x8] sm:$0xff]
    %v48 = vld [vmem:[#allocation5] sm:$0xff]
    %v49 = vld [vmem:[#allocation5 + $0x8] sm:$0xff]
    %v50 = vadd.f32 %v46, %v48
    %v51 = vadd.f32 %v47, %v49
    %vm52 = vcmask 261120
    %v53 = vsel %vm52, %v50, 0.0
    %54 = vadd.xlane.f32.xlu0 %v53
    %v55 = vpop.xlane.xlu0 %54
    %v56 = vsel %vm52, %v51, 0.0
    %57 = vadd.xlane.f32.xlu0 %v56
    %v58 = vpop.xlane.xlu0 %57
    %v59 = vmul.f32 %v50, %v50
    %v60 = vmul.f32 %v51, %v51
    %v61 = vsel %vm52, %v59, 0.0
    %62 = vadd.xlane.f32.xlu0 %v61
    %v63 = vpop.xlane.xlu0 %62
    %v64 = vsel %vm52, %v60, 0.0
    %65 = vadd.xlane.f32.xlu0 %v64
    %v66 = vpop.xlane.xlu0 %65
    %v67 = vmul.f32 %v55, 0.03125
    %v68 = vmul.f32 %v58, 0.03125
    %v69 = vmul.f32 %v63, 0.03125
    %v70 = vmul.f32 %v66, 0.03125
    %v71 = vmul.f32 %v67, %v67
    %v72 = vmul.f32 %v68, %v68
    %v73 = vsub.f32 %v69, %v71
    %v74 = vsub.f32 %v70, %v72
    %v75 = vmax.f32 %v73, 0.0
    %v76 = vmax.f32 %v74, 0.0
    %v77 = vadd.f32 %v75, 1e-05
    %v78 = vadd.f32 %v76, 1e-05
    %v79 = vrsqrt.pop %v77
    %v80 = vrsqrt.pop %v78
    %v81 = vld [vmem:[%s2] sm:$0x1]
    %v82 = vld [vmem:[%s3] sm:$0x1]
    %v84 = vlaneseq
    %v85 = vshrl.u32 %v84, 7
    %v86 = vsub.s32 0, %v85
    %v87 = vrot.slane %v81, %v86
    %v89 = vmul.f32 %v79, %v87
    %v90 = vmul.f32 %v80, %v87
    %v91 = vmul.f32 %v67, %v89
    %v92 = vmul.f32 %v68, %v90
    %v94 = vlaneseq
    %v95 = vshrl.u32 %v94, 7
    %v96 = vsub.s32 0, %v95
    %v97 = vrot.slane %v82, %v96
    %v99 = vsub.f32 %v97, %v91
    %v100 = vsub.f32 %v97, %v92
    %v101 = vmul.f32 %v50, %v89
    %v102 = vmul.f32 %v51, %v90
    %v103 = vadd.f32 %v101, %v99
    %v104 = vadd.f32 %v102, %v100
    %105 = vst.msk [vmem:[#allocation7] sm:$0xff] %vm52, %v103
    %106 = vst.msk [vmem:[#allocation7 + $0x8] sm:$0xff] %vm52, %v104
    // Predicated region
    $region26: #{tpu_custom_call.1} parent=1 // pred_check
      _
    $region27: #{tpu_custom_call.1} parent=1 // pred_check_branch
      %108 = sbr.rel (0) target = $region29
    $region28: #{tpu_custom_call.1} parent=1 // pred_region
      %s110 = ssub.s32 256, 256
      %111 = vsyncadd [#allocation4], %s110
      %s112 = sshll.u32 [#allocation7], 4
      %s113 = int_to_ptr.vmem [resolvable:$true] %s112
      %118 = dma.vmem_to_hbm [thread:$0]  %s113, 256, %s4, [#allocation4], 128, 128, 8
    $region29: #{tpu_custom_call.1} parent=1 // pred_fallthru
      _
    // Predicated region
    $region30: #{tpu_custom_call.1} parent=1 // pred_check
      _
    $region31: #{tpu_custom_call.1} parent=1 // pred_check_branch
      %120 = sbr.rel (0) target = $region33
    $region32: #{tpu_custom_call.1} parent=1 // pred_region
      %121 = dma.done [#allocation4], 256
    $region33: #{tpu_custom_call.1} parent=1 // pred_fallthru
      _
    %122 = vsyncpa [#allocation3], 1
    %123 = vsyncpa [#allocation6], 1
    %124 = vsyncpa [#allocation4], 1

</llo_original>
